<compile_context>
chip_gen: v7x
topology: tpu7x:2x2x1
jax: 0.10.0
libtpu: 0.0.40
codegen_flags: <defaults>
</compile_context>

<pallas_src>
import numpy as np
import jax
import jax.numpy as jnp
from jax.experimental import pallas as pl
from jax.experimental.pallas import tpu as pltpu


# ----------------------------------------------------------------------------
# Pass 1: separable D/H pooling taps + lane-dense 1x1x1 conv + per-sample BN stats.
#   xw_ref : (D+2, H+2, Lin) bf16   W-tap already folded, zero-padded D/H halo
#   w_ref  : (Lin, Lout)    bf16    block-diagonal conv weight, 1/27 folded in
#   y_ref  : (D*H, Lout)    bf16    lane-dense pre-BN activation (== (D*H*W, Cout))
#   sum_ref: (1, Lout)      f32     per-sample column sums
#   ssq_ref: (1, Lout)      f32     per-sample column sums of squares
# ----------------------------------------------------------------------------
def _make_pool_conv_stats_kernel(dd, hh):
    def kernel(xw_ref, w_ref, y_ref, sum_ref, ssq_ref):
        # Upcast once, then separable box filter: 2 adds along H (sublane axis),
        # 2 adds along D (leading axis) — full 128-lane occupancy per vreg op.
        xr = xw_ref[...].astype(jnp.float32)                       # (dd+2, hh+2, Lin)
        xh = xr[:, 0:hh, :] + xr[:, 1:hh + 1, :] + xr[:, 2:hh + 2, :]
        pooled = xh[0:dd] + xh[1:dd + 1] + xh[2:dd + 2]            # (dd, hh, Lin)
        pooled = pooled.reshape(dd * hh, pooled.shape[-1]).astype(jnp.bfloat16)

        # 1x1x1 conv as one lane-dense MXU matmul against the block-diagonal weight
        # (output columns come out directly in (W, Cout) row-major order).
        y = jnp.dot(pooled, w_ref[...], preferred_element_type=jnp.float32)
        yb = y.astype(jnp.bfloat16)
        y_ref[...] = yb

        # BN statistics of exactly what pass 2 reads back (bf16-rounded), f32 sums.
        yf = yb.astype(jnp.float32)
        sum_ref[...] = jnp.sum(yf, axis=0, keepdims=True)
        ssq_ref[...] = jnp.sum(yf * yf, axis=0, keepdims=True)

    return kernel


# ----------------------------------------------------------------------------
# Pass 2: elementwise BN affine + exact erf-GELU on the stored bf16 activation.
#   y_ref     : (TP, Lout) bf16
#   scale_ref : (1, Lout)  f32   gamma * rsqrt(var + eps), tiled over W groups
#   shift_ref : (1, Lout)  f32   beta - mean * scale, tiled over W groups
#   o_ref     : (TP, Lout) f32   lane-dense output tile
# ----------------------------------------------------------------------------
def _bn_gelu_kernel(y_ref, scale_ref, shift_ref, o_ref):
    z = y_ref[...].astype(jnp.float32) * scale_ref[...] + shift_ref[...]
    # exact GELU (PyTorch nn.GELU default, approximate='none'); erf input kept f32.
    o_ref[...] = 0.5 * z * (1.0 + jax.lax.erf(z * 0.7071067811865476))


def _vmem_limit_bytes():
    """~half of physical VMEM: 64 MiB on 128-MiB parts (v5e/v6e), 32 MiB on v7x."""
    try:
        cap = int(pltpu.get_tpu_info().vmem_capacity_bytes)
    except Exception:
        cap = 0
    if cap <= 0:
        return 32 * 1024 * 1024
    return min(64 * 1024 * 1024, max(32 * 1024 * 1024, cap // 2))


def _row_tiling(rows, bytes_per_row, cap_rows=2048, budget=4 * 1024 * 1024):
    """Pick a large pass-2 row tile (multiple of 8) and the (possibly padded) row count."""
    cap = max(8, min(cap_rows, (budget // max(bytes_per_row, 1)) // 8 * 8))
    upper = min(cap, rows - rows % 8)
    for t in range(upper, 7, -8):
        if rows % t == 0:
            return t, rows                     # exact divisor, no padding needed
    t = min(cap, max(8, ((rows + 7) // 8) * 8))
    t = max(8, (t // 8) * 8)
    return t, t * ((rows + t - 1) // t)        # pad-and-slice fallback


def inception_pool_forward(x_ncdhw, conv_w, conv_b, gamma, beta):
    # Conv bias is exactly cancelled by training-mode BatchNorm mean subtraction.
    del conv_b
    n, cin, d, h, wsz = x_ncdhw.shape
    cout = conv_w.shape[0]
    dh = d * h
    lin_raw, lout_raw = wsz * cin, wsz * cout
    lin = 128 * pl.cdiv(lin_raw, 128)          # lane-dense padded widths (no-op here)
    lout = 128 * pl.cdiv(lout_raw, 128)
    vmem_limit = _vmem_limit_bytes()

    # --- prep: channels-last, zero-pad halo, fold W-tap, lane-dense bf16 slab --------
    x = jnp.transpose(x_ncdhw, (0, 2, 3, 4, 1)).astype(jnp.float32)   # NCDHW -> NDHWC
    xpad = jnp.pad(x, ((0, 0), (1, 1), (1, 1), (1, 1), (0, 0)))
    xw = (xpad[:, :, :, 0:wsz, :] + xpad[:, :, :, 1:wsz + 1, :]
          + xpad[:, :, :, 2:wsz + 2, :])                              # (N,D+2,H+2,W,Cin)
    xw_dense = xw.reshape(n, d + 2, h + 2, lin_raw)
    if lin != lin_raw:
        xw_dense = jnp.pad(xw_dense, ((0, 0), (0, 0), (0, 0), (0, lin - lin_raw)))
    xw_dense = xw_dense.astype(jnp.bfloat16)

    # Block-diagonal 1x1x1 conv weight: (Cout,Cin,1,1,1) -> W copies of (Cin,Cout) on
    # the diagonal of a (W*Cin, W*Cout) matrix; fold the 1/27 pooling divisor; bf16.
    w_small = conv_w.reshape(cout, cin).T.astype(jnp.float32) * (1.0 / 27.0)
    w_block = jnp.kron(jnp.eye(wsz, dtype=jnp.float32), w_small)      # (lin_raw, lout_raw)
    w_block = jnp.pad(w_block, ((0, lin - lin_raw), (0, lout - lout_raw)))
    w_block = w_block.astype(jnp.bfloat16)

    # --- pass 1: pooling + conv + per-sample BN statistics ---------------------------
    flops1 = n * (2 * (d + 2) * h * lin + 2 * d * h * lin
                  + 2 * dh * lin * lout + 3 * dh * lout)
    bytes1 = (n * (d + 2) * (h + 2) * lin * 2 + lin * lout * 2
              + n * dh * lout * 2 + 2 * n * lout * 4)
    y_dense, ssum, sssq = pl.pallas_call(
        _make_pool_conv_stats_kernel(d, h),
        grid=(n,),
        in_specs=[
            pl.BlockSpec((None, d + 2, h + 2, lin), lambda i: (i, 0, 0, 0)),
            pl.BlockSpec((lin, lout), lambda i: (0, 0)),
        ],
        out_specs=[
            pl.BlockSpec((None, dh, lout), lambda i: (i, 0, 0)),
            pl.BlockSpec((None, 1, lout), lambda i: (i, 0, 0)),
            pl.BlockSpec((None, 1, lout), lambda i: (i, 0, 0)),
        ],
        out_shape=(
            jax.ShapeDtypeStruct((n, dh, lout), jnp.bfloat16),
            jax.ShapeDtypeStruct((n, 1, lout), jnp.float32),
            jax.ShapeDtypeStruct((n, 1, lout), jnp.float32),
        ),
        compiler_params=pltpu.CompilerParams(
            dimension_semantics=("parallel",),            # per-sample outputs => shardable
            vmem_limit_bytes=vmem_limit),
        cost_estimate=pl.CostEstimate(flops=flops1, transcendentals=0,
                                      bytes_accessed=bytes1),
    )(xw_dense, w_block)

    # --- glue: training-mode BatchNorm3d affine from global batch statistics ---------
    # NOTE: E[x^2]-E[x]^2 in f32 on bf16-rounded activations — fine at this scale;
    # switch to a shifted/two-pass moment if |mean| >> std on real data.
    ssum_c = jnp.sum(ssum, axis=(0, 1))[:lout_raw].reshape(wsz, cout).sum(axis=0)
    sssq_c = jnp.sum(sssq, axis=(0, 1))[:lout_raw].reshape(wsz, cout).sum(axis=0)
    ptot = n * d * h * wsz
    mean = ssum_c / ptot
    var = jnp.maximum(sssq_c / ptot - mean * mean, 0.0)   # biased variance, like BN
    inv = jax.lax.rsqrt(var + 1e-3)
    scale_c = gamma.astype(jnp.float32) * inv
    shift_c = beta.astype(jnp.float32) - mean * scale_c
    scale_d = jnp.pad(jnp.tile(scale_c, wsz), (0, lout - lout_raw)).reshape(1, lout)
    shift_d = jnp.pad(jnp.tile(shift_c, wsz), (0, lout - lout_raw)).reshape(1, lout)

    # --- pass 2: BN affine + GELU, row-tiled, lane-dense bf16-in / f32-out ------------
    rows = n * dh
    tp, rows_pad = _row_tiling(rows, lout * (2 + 4))
    y_flat = y_dense.reshape(rows, lout)                  # free: same row-major bytes
    if rows_pad != rows:
        y_flat = jnp.pad(y_flat, ((0, rows_pad - rows), (0, 0)))
    flops2 = rows_pad * lout * 10
    bytes2 = rows_pad * lout * 2 + 2 * lout * 4 + rows_pad * lout * 4
    out = pl.pallas_call(
        _bn_gelu_kernel,
        grid=(rows_pad // tp,),
        in_specs=[
            pl.BlockSpec((tp, lout), lambda i: (i, 0)),
            pl.BlockSpec((1, lout), lambda i: (0, 0)),
            pl.BlockSpec((1, lout), lambda i: (0, 0)),
        ],
        out_specs=pl.BlockSpec((tp, lout), lambda i: (i, 0)),
        out_shape=jax.ShapeDtypeStruct((rows_pad, lout), jnp.float32),
        compiler_params=pltpu.CompilerParams(
            dimension_semantics=("parallel",),            # megacore-shardable on v7x
            vmem_limit_bytes=vmem_limit),
        cost_estimate=pl.CostEstimate(flops=flops2, transcendentals=rows_pad * lout,
                                      bytes_accessed=bytes2),
    )(y_flat, scale_d, shift_d)

    if rows_pad != rows:
        out = out[:rows]
    if lout != lout_raw:
        out = out[:, :lout_raw]
    y5 = out.reshape(n, d, h, wsz, cout)                  # free: same row-major bytes
    return jnp.transpose(y5, (0, 4, 1, 2, 3))             # NDHWC -> NCDHW


# ----------------------------------------------------------------------------
# Pure-JAX reference mirroring the PyTorch forward (for correctness checking).
# ----------------------------------------------------------------------------
def _reference_forward(x, conv_w, conv_b, gamma, beta):
    n, c, d, h, w = x.shape
    xp = jnp.pad(x, ((0, 0), (0, 0), (1, 1), (1, 1), (1, 1)))
    pooled = jnp.zeros_like(x)
    for kd in range(3):
        for kh in range(3):
            for kw in range(3):
                pooled = pooled + xp[:, :, kd:kd + d, kh:kh + h, kw:kw + w]
    pooled = pooled / 27.0                               # count_include_pad=True
    y = jax.lax.conv_general_dilated(
        pooled, conv_w, window_strides=(1, 1, 1), padding='VALID',
        dimension_numbers=('NCDHW', 'OIDHW', 'NCDHW'))
    y = y + conv_b.reshape(1, -1, 1, 1, 1)
    mean = jnp.mean(y, axis=(0, 2, 3, 4), keepdims=True)
    var = jnp.var(y, axis=(0, 2, 3, 4), keepdims=True)   # biased, like training BN
    y = (y - mean) * jax.lax.rsqrt(var + 1e-3)
    y = y * gamma.reshape(1, -1, 1, 1, 1) + beta.reshape(1, -1, 1, 1, 1)
    return 0.5 * y * (1.0 + jax.lax.erf(y * 0.7071067811865476))


if __name__ == "__main__":
    # Small shapes consistent with the module: in_features=16, out_features=16.
    N, IN_F, OUT_F, D, H, W = 2, 16, 16, 4, 8, 8

    key = jax.random.PRNGKey(0)
    kx, kw, kb, kg, kbe = jax.random.split(key, 5)
    x = jax.random.normal(kx, (N, IN_F, D, H, W), jnp.float32)        # NCDHW

    fan_in = IN_F                                   # kernel_size=1 -> fan_in = Cin
    bound = 1.0 / np.sqrt(fan_in)
    conv_w = jax.random.uniform(kw, (OUT_F, IN_F, 1, 1, 1), jnp.float32, -bound, bound)
    conv_b = jax.random.uniform(kb, (OUT_F,), jnp.float32, -bound, bound)
    gamma = 1.0 + 0.1 * jax.random.normal(kg, (OUT_F,), jnp.float32)
    beta = 0.1 * jax.random.normal(kbe, (OUT_F,), jnp.float32)

    fwd = jax.jit(inception_pool_forward)
    y = jax.block_until_ready(fwd(x, conv_w, conv_b, gamma, beta))
    assert y.shape == (N, OUT_F, D, H, W), y.shape

    y_ref = jax.block_until_ready(_reference_forward(x, conv_w, conv_b, gamma, beta))
    # bf16 slab / weights / stored activation (with f32 accumulation everywhere)
    # => a few-1e-3 deviation budget; tolerance is intentionally loose for bf16.
    np.testing.assert_allclose(np.asarray(y), np.asarray(y_ref), rtol=2e-2, atol=2e-2)
    print("KERNEL_OK")
</pallas_src>

<mosaic_0001>
module attributes {stable_mosaic.version = 11 : i64} {
  func.func @kernel(%arg0: i32, %arg1: memref<1x6x10x128xbf16, #tpu.memory_space<vmem>>, %arg2: memref<128x128xbf16, #tpu.memory_space<vmem>>, %arg3: memref<1x32x128xbf16, #tpu.memory_space<vmem>>, %arg4: memref<1x1x128xf32, #tpu.memory_space<vmem>>, %arg5: memref<1x1x128xf32, #tpu.memory_space<vmem>>) attributes {dimension_semantics = [#tpu.dimension_semantics<parallel>], iteration_bounds = array<i64: 2>, scalar_prefetch = 0 : i64, scratch_operands = 0 : i64, tpu.core_type = #tpu.core_type<tc>, window_params = [{transform_indices = @transform_0, window_bounds = array<i64: 1, 6, 10, 128>}, {pipeline_mode = #tpu.pipeline_mode<synchronous>, transform_indices = @transform_1, window_bounds = array<i64: 128, 128>}, {transform_indices = @transform_2, window_bounds = array<i64: 1, 32, 128>}, {transform_indices = @transform_3, window_bounds = array<i64: 1, 1, 128>}, {transform_indices = @transform_4, window_bounds = array<i64: 1, 1, 128>}]} {
    %c0 = arith.constant 0 : index
    %c0_0 = arith.constant 0 : index
    %c0_1 = arith.constant 0 : index
    %c0_2 = arith.constant 0 : index
    %0 = vector.load %arg1[%c0, %c0_0, %c0_1, %c0_2] : memref<1x6x10x128xbf16, #tpu.memory_space<vmem>>, vector<1x6x10x128xbf16>
    %1 = vector.shape_cast %0 : vector<1x6x10x128xbf16> to vector<6x10x128xbf16>
    %2 = arith.extf %1 : vector<6x10x128xbf16> to vector<6x10x128xf32>
    %3 = vector.extract_strided_slice %2 {offsets = [0, 0, 0], sizes = [6, 8, 128], strides = [1, 1, 1]} : vector<6x10x128xf32> to vector<6x8x128xf32>
    %4 = vector.extract_strided_slice %2 {offsets = [0, 1, 0], sizes = [6, 8, 128], strides = [1, 1, 1]} : vector<6x10x128xf32> to vector<6x8x128xf32>
    %5 = arith.addf %3, %4 : vector<6x8x128xf32>
    %6 = vector.extract_strided_slice %2 {offsets = [0, 2, 0], sizes = [6, 8, 128], strides = [1, 1, 1]} : vector<6x10x128xf32> to vector<6x8x128xf32>
    %7 = arith.addf %5, %6 : vector<6x8x128xf32>
    %8 = vector.extract_strided_slice %7 {offsets = [0, 0, 0], sizes = [4, 8, 128], strides = [1, 1, 1]} : vector<6x8x128xf32> to vector<4x8x128xf32>
    %9 = vector.extract_strided_slice %7 {offsets = [1, 0, 0], sizes = [4, 8, 128], strides = [1, 1, 1]} : vector<6x8x128xf32> to vector<4x8x128xf32>
    %10 = arith.addf %8, %9 : vector<4x8x128xf32>
    %11 = vector.extract_strided_slice %7 {offsets = [2, 0, 0], sizes = [4, 8, 128], strides = [1, 1, 1]} : vector<6x8x128xf32> to vector<4x8x128xf32>
    %12 = arith.addf %10, %11 : vector<4x8x128xf32>
    %13 = vector.shape_cast %12 : vector<4x8x128xf32> to vector<32x128xf32>
    %14 = arith.truncf %13 : vector<32x128xf32> to vector<32x128xbf16>
    %c0_3 = arith.constant 0 : index
    %c0_4 = arith.constant 0 : index
    %15 = vector.load %arg2[%c0_3, %c0_4] : memref<128x128xbf16, #tpu.memory_space<vmem>>, vector<128x128xbf16>
    %cst = arith.constant dense<0.000000e+00> : vector<32x128xf32>
    %16 = tpu.matmul %14, %15, %cst {dimension_numbers = #tpu.dot_dimension_numbers<[1], [0], [0], [1], [0, 0, 1, 1], [], []>} : vector<32x128xbf16>, vector<128x128xbf16>, vector<32x128xf32> -> vector<32x128xf32>
    %17 = arith.truncf %16 : vector<32x128xf32> to vector<32x128xbf16>
    %c0_5 = arith.constant 0 : index
    %c0_6 = arith.constant 0 : index
    %c0_7 = arith.constant 0 : index
    %18 = vector.load %arg3[%c0_5, %c0_6, %c0_7] : memref<1x32x128xbf16, #tpu.memory_space<vmem>>, vector<1x32x128xbf16>
    %19 = vector.shape_cast %18 : vector<1x32x128xbf16> to vector<32x128xbf16>
    %20 = vector.shape_cast %17 : vector<32x128xbf16> to vector<1x32x128xbf16>
    tpu.vector_store %arg3[%c0_5, %c0_6, %c0_7], %20 {strides = array<i32>} : memref<1x32x128xbf16, #tpu.memory_space<vmem>>, vector<1x32x128xbf16>,
    %21 = arith.extf %17 : vector<32x128xbf16> to vector<32x128xf32>
    %cst_8 = arith.constant dense<0.000000e+00> : vector<128xf32>
    %22 = vector.multi_reduction <add>, %21, %cst_8 [0] : vector<32x128xf32> to vector<128xf32>
    %23 = vector.shape_cast %22 : vector<128xf32> to vector<1x128xf32>
    %c0_9 = arith.constant 0 : index
    %c0_10 = arith.constant 0 : index
    %c0_11 = arith.constant 0 : index
    %24 = vector.load %arg4[%c0_9, %c0_10, %c0_11] : memref<1x1x128xf32, #tpu.memory_space<vmem>>, vector<1x1x128xf32>
    %25 = vector.shape_cast %24 : vector<1x1x128xf32> to vector<1x128xf32>
    %26 = vector.shape_cast %23 : vector<1x128xf32> to vector<1x1x128xf32>
    tpu.vector_store %arg4[%c0_9, %c0_10, %c0_11], %26 {strides = array<i32>} : memref<1x1x128xf32, #tpu.memory_space<vmem>>, vector<1x1x128xf32>,
    %27 = arith.mulf %21, %21 : vector<32x128xf32>
    %cst_12 = arith.constant dense<0.000000e+00> : vector<128xf32>
    %28 = vector.multi_reduction <add>, %27, %cst_12 [0] : vector<32x128xf32> to vector<128xf32>
    %29 = vector.shape_cast %28 : vector<128xf32> to vector<1x128xf32>
    %c0_13 = arith.constant 0 : index
    %c0_14 = arith.constant 0 : index
    %c0_15 = arith.constant 0 : index
    %30 = vector.load %arg5[%c0_13, %c0_14, %c0_15] : memref<1x1x128xf32, #tpu.memory_space<vmem>>, vector<1x1x128xf32>
    %31 = vector.shape_cast %30 : vector<1x1x128xf32> to vector<1x128xf32>
    %32 = vector.shape_cast %29 : vector<1x128xf32> to vector<1x1x128xf32>
    tpu.vector_store %arg5[%c0_13, %c0_14, %c0_15], %32 {strides = array<i32>} : memref<1x1x128xf32, #tpu.memory_space<vmem>>, vector<1x1x128xf32>,
    return
  }
  func.func @transform_0(%arg0: i32) -> (i32, i32, i32, i32) {
    %c0_i32 = arith.constant 0 : i32
    %c0_i32_0 = arith.constant 0 : i32
    %c0_i32_1 = arith.constant 0 : i32
    %c0_i32_2 = arith.constant 0 : i32
    return %arg0, %c0_i32, %c0_i32_0, %c0_i32_1 : i32, i32, i32, i32
  }
  func.func @transform_1(%arg0: i32) -> (i32, i32) {
    %c0_i32 = arith.constant 0 : i32
    %c0_i32_0 = arith.constant 0 : i32
    %c0_i32_1 = arith.constant 0 : i32
    return %c0_i32, %c0_i32_0 : i32, i32
  }
  func.func @transform_2(%arg0: i32) -> (i32, i32, i32) {
    %c0_i32 = arith.constant 0 : i32
    %c0_i32_0 = arith.constant 0 : i32
    %c0_i32_1 = arith.constant 0 : i32
    return %arg0, %c0_i32, %c0_i32_0 : i32, i32, i32
  }
  func.func @transform_3(%arg0: i32) -> (i32, i32, i32) {
    %c0_i32 = arith.constant 0 : i32
    %c0_i32_0 = arith.constant 0 : i32
    %c0_i32_1 = arith.constant 0 : i32
    return %arg0, %c0_i32, %c0_i32_0 : i32, i32, i32
  }
  func.func @transform_4(%arg0: i32) -> (i32, i32, i32) {
    %c0_i32 = arith.constant 0 : i32
    %c0_i32_0 = arith.constant 0 : i32
    %c0_i32_1 = arith.constant 0 : i32
    return %arg0, %c0_i32, %c0_i32_0 : i32, i32, i32
  }
}

module attributes {stable_mosaic.version = 11 : i64} {
  func.func @_bn_gelu_kernel(%arg0: i32, %arg1: memref<64x128xbf16, #tpu.memory_space<vmem>>, %arg2: memref<1x128xf32, #tpu.memory_space<vmem>>, %arg3: memref<1x128xf32, #tpu.memory_space<vmem>>, %arg4: memref<64x128xf32, #tpu.memory_space<vmem>>) attributes {dimension_semantics = [#tpu.dimension_semantics<parallel>], iteration_bounds = array<i64: 1>, scalar_prefetch = 0 : i64, scratch_operands = 0 : i64, tpu.core_type = #tpu.core_type<tc>, window_params = [{transform_indices = @transform_0, window_bounds = array<i64: 64, 128>}, {pipeline_mode = #tpu.pipeline_mode<synchronous>, transform_indices = @transform_1, window_bounds = array<i64: 1, 128>}, {pipeline_mode = #tpu.pipeline_mode<synchronous>, transform_indices = @transform_2, window_bounds = array<i64: 1, 128>}, {transform_indices = @transform_3, window_bounds = array<i64: 64, 128>}]} {
    %c0 = arith.constant 0 : index
    %c0_0 = arith.constant 0 : index
    %0 = vector.load %arg1[%c0, %c0_0] : memref<64x128xbf16, #tpu.memory_space<vmem>>, vector<64x128xbf16>
    %1 = arith.extf %0 : vector<64x128xbf16> to vector<64x128xf32>
    %c0_1 = arith.constant 0 : index
    %c0_2 = arith.constant 0 : index
    %2 = vector.load %arg2[%c0_1, %c0_2] : memref<1x128xf32, #tpu.memory_space<vmem>>, vector<1x128xf32>
    %3 = vector.broadcast %2 : vector<1x128xf32> to vector<64x128xf32>
    %4 = arith.mulf %1, %3 : vector<64x128xf32>
    %c0_3 = arith.constant 0 : index
    %c0_4 = arith.constant 0 : index
    %5 = vector.load %arg3[%c0_3, %c0_4] : memref<1x128xf32, #tpu.memory_space<vmem>>, vector<1x128xf32>
    %6 = vector.broadcast %5 : vector<1x128xf32> to vector<64x128xf32>
    %7 = arith.addf %4, %6 : vector<64x128xf32>
    %cst = arith.constant 5.000000e-01 : f32
    %8 = vector.broadcast %cst : f32 to vector<64x128xf32>
    %9 = arith.mulf %8, %7 : vector<64x128xf32>
    %cst_5 = arith.constant 0.707106769 : f32
    %10 = vector.broadcast %cst_5 : f32 to vector<64x128xf32>
    %11 = arith.mulf %7, %10 : vector<64x128xf32>
    %12 = math.erf %11 : vector<64x128xf32>
    %cst_6 = arith.constant 1.000000e+00 : f32
    %13 = vector.broadcast %cst_6 : f32 to vector<64x128xf32>
    %14 = arith.addf %13, %12 : vector<64x128xf32>
    %15 = arith.mulf %9, %14 : vector<64x128xf32>
    %c0_7 = arith.constant 0 : index
    %c0_8 = arith.constant 0 : index
    %16 = vector.load %arg4[%c0_7, %c0_8] : memref<64x128xf32, #tpu.memory_space<vmem>>, vector<64x128xf32>
    tpu.vector_store %arg4[%c0_7, %c0_8], %15 {strides = array<i32>} : memref<64x128xf32, #tpu.memory_space<vmem>>, vector<64x128xf32>,
    return
  }
  func.func @transform_0(%arg0: i32) -> (i32, i32) {
    %c0_i32 = arith.constant 0 : i32
    %c0_i32_0 = arith.constant 0 : i32
    return %arg0, %c0_i32 : i32, i32
  }
  func.func @transform_1(%arg0: i32) -> (i32, i32) {
    %c0_i32 = arith.constant 0 : i32
    %c0_i32_0 = arith.constant 0 : i32
    %c0_i32_1 = arith.constant 0 : i32
    return %c0_i32, %c0_i32_0 : i32, i32
  }
  func.func @transform_2(%arg0: i32) -> (i32, i32) {
    %c0_i32 = arith.constant 0 : i32
    %c0_i32_0 = arith.constant 0 : i32
    %c0_i32_1 = arith.constant 0 : i32
    return %c0_i32, %c0_i32_0 : i32, i32
  }
  func.func @transform_3(%arg0: i32) -> (i32, i32) {
    %c0_i32 = arith.constant 0 : i32
    %c0_i32_0 = arith.constant 0 : i32
    return %arg0, %c0_i32 : i32, i32
  }
}

</mosaic_0001>

<llo_original>
// kernel: tile.13
$region0: #{tile.13}
  #allocation0 [shape = 's32[1]{0}', space=sflag, size = 0x4, scoped, tag = 'scoped memory for tile.13']
  %s0 = inlined_call_operand.vmem [shape: f32[16], index: 0, kind: input, shape index: {}]
  %s1 = inlined_call_operand.vmem [shape: f32[8,16], index: 1, kind: output, shape index: {}]
  // Predicated region
  $region2: #{tile.13} parent=0 // pred_check
    _
  $region3: #{tile.13} parent=0 // pred_check_branch
    %3 = sbr.rel (0) target = $region5
  $region4: #{tile.13} parent=0 // pred_region
    _
  $region5: #{tile.13} parent=0 // pred_fallthru
    _
  %v4 = vld [vmem:[%s0] ss:$0 sm:$0xff]
  %5 = vst [vmem:[%s1] sm:$0xff] %v4

// kernel: inception_pool_forward.2
$region0: #{inception_pool_forward.2}
  #allocation0 [shape = 'u32[]', space=smem, size = 0x4, offset = 0x4, fixed_abs, tag = 'smem constant byte address 0x4 - core index']
  #allocation1 [shape = 'u32[144,128]{1,0:T(1,128)}', space=vmem, size = 0x12000, scoped, tag = 'internal scratch']
  %s0 = inlined_call_operand.vmem [shape: bf16[2,6,10,128], index: 0, kind: input, shape index: {}]
  %s1 = inlined_call_operand.vmem [shape: bf16[128,128], index: 1, kind: input, shape index: {}]
  %s2 = inlined_call_operand.vmem [shape: bf16[2,32,128], index: 2, kind: output, shape index: {0}]
  %s3 = inlined_call_operand.vmem [shape: f32[2,1,128], index: 3, kind: output, shape index: {1}]
  %s4 = inlined_call_operand.vmem [shape: f32[2,1,128], index: 4, kind: output, shape index: {2}]
  %5 = xla_tuple %s2, %s3, %s4
  %s6 = sld [smem:[#allocation0]]
  $region57: #{inception_pool_forward.2} parent=0
    _
  %s8 = ssub.s32 1, %s6
  %s9 = scalar_select 0, %s8, %s6
  loop: start=0, step=1, limit=4
  $region2: #{inception_pool_forward.2} parent=0 // loop_pre_header
    _
  $region3: #{inception_pool_forward.2} parent=0 // loop_header
    %s11 = sphi 0, %s15
    %p12 = scmp.ge.s32.totalorder %s11, 4
    %s21 = sphi 0, %s23
    %s24 = sphi 0, %s21
    %s25 = sphi 0, %s24
    %s41 = sphi 0, %s25
    %s45 = sphi 0, %s45
    %s47 = sphi 0, %s45
    %s48 = sphi 0, %s47
    %s62 = sphi 0, %s48
    %s68 = sphi 0, %s70
    %s71 = sphi 0, %s68
    %s72 = sphi 0, %s71
    %s88 = sphi 0, %s72
    %s94 = sphi 0, %s96
    %s97 = sphi 0, %s94
    %s98 = sphi 0, %s97
    %s114 = sphi 0, %s98
    %s120 = sphi 0, %s122
    %s123 = sphi 0, %s120
    %s124 = sphi 0, %s123
    %s140 = sphi 0, %s124
  $region4: #{inception_pool_forward.2} parent=0 // loop_header_branch
    %14 = sbr.rel (%p12) target = $region8
  $region5: #{inception_pool_forward.2} parent=0 // loop_body
    %s16 = ssub.s32 %s11, 1
    %s17 = ssub.s32 %s11, 2
    %s18 = sadd.s32 %s11, 1
    %s19 = ssub.s32 %s11, %s18
    %p20 = scmp.eq.s32.totalorder %s19, 0
    %s22 = sadd.s32 %s21, 1
    %s23 = scalar_select %p20, %s21, %s22
    %p26 = pneg %p20
    %p27 = scmp.eq.s32.totalorder %s11, 1
    %p28 = por %p26, %p27
    %p29 = scmp.ne.s32.totalorder %s21, %s24
    %p30 = scmp.eq.s32.totalorder %s11, 0
    %p31 = por %p29, %p30
    %p32 = scmp.ne.s32.totalorder %s21, %s24
    %p33 = scmp.eq.s32.totalorder %s16, 1
    %p34 = por %p32, %p33
    %p35 = scmp.ne.s32.totalorder %s24, %s25
    %p36 = scmp.eq.s32.totalorder %s16, 0
    %p37 = por %p35, %p36
    %p38 = scmp.ne.s32.totalorder %s24, %s25
    %p39 = scmp.eq.s32.totalorder %s17, 1
    %p40 = por %p38, %p39
    %p42 = scmp.ne.s32.totalorder %s25, %s41
    %p43 = scmp.eq.s32.totalorder %s17, 0
    %p44 = por %p42, %p43
    %s46 = sadd.s32 %s45, 1
    %p49 = scmp.eq.s32.totalorder %s11, 1
    %p50 = scmp.ne.s32.totalorder %s45, %s47
    %p51 = scmp.eq.s32.totalorder %s11, 0
    %p52 = por %p50, %p51
    %p53 = scmp.ne.s32.totalorder %s45, %s47
    %p54 = scmp.eq.s32.totalorder %s16, 1
    %p55 = por %p53, %p54
    %p56 = scmp.ne.s32.totalorder %s47, %s48
    %p57 = scmp.eq.s32.totalorder %s16, 0
    %p58 = por %p56, %p57
    %p59 = scmp.ne.s32.totalorder %s47, %s48
    %p60 = scmp.eq.s32.totalorder %s17, 1
    %p61 = por %p59, %p60
    %p63 = scmp.ne.s32.totalorder %s48, %s62
    %p64 = scmp.eq.s32.totalorder %s17, 0
    %p65 = por %p63, %p64
    %s66 = ssub.s32 %s11, %s18
    %p67 = scmp.eq.s32.totalorder %s66, 0
    %s69 = sadd.s32 %s68, 1
    %s70 = scalar_select %p67, %s68, %s69
    %p73 = pneg %p67
    %p74 = scmp.eq.s32.totalorder %s11, 1
    %p75 = por %p73, %p74
    %p76 = scmp.ne.s32.totalorder %s68, %s71
    %p77 = scmp.eq.s32.totalorder %s11, 0
    %p78 = por %p76, %p77
    %p79 = scmp.ne.s32.totalorder %s68, %s71
    %p80 = scmp.eq.s32.totalorder %s16, 1
    %p81 = por %p79, %p80
    %p82 = scmp.ne.s32.totalorder %s71, %s72
    %p83 = scmp.eq.s32.totalorder %s16, 0
    %p84 = por %p82, %p83
    %p85 = scmp.ne.s32.totalorder %s71, %s72
    %p86 = scmp.eq.s32.totalorder %s17, 1
    %p87 = por %p85, %p86
    %p89 = scmp.ne.s32.totalorder %s72, %s88
    %p90 = scmp.eq.s32.totalorder %s17, 0
    %p91 = por %p89, %p90
    %s92 = ssub.s32 %s11, %s18
    %p93 = scmp.eq.s32.totalorder %s92, 0
    %s95 = sadd.s32 %s94, 1
    %s96 = scalar_select %p93, %s94, %s95
    %p99 = pneg %p93
    %p100 = scmp.eq.s32.totalorder %s11, 1
    %p101 = por %p99, %p100
    %p102 = scmp.ne.s32.totalorder %s94, %s97
    %p103 = scmp.eq.s32.totalorder %s11, 0
    %p104 = por %p102, %p103
    %p105 = scmp.ne.s32.totalorder %s94, %s97
    %p106 = scmp.eq.s32.totalorder %s16, 1
    %p107 = por %p105, %p106
    %p108 = scmp.ne.s32.totalorder %s97, %s98
    %p109 = scmp.eq.s32.totalorder %s16, 0
    %p110 = por %p108, %p109
    %p111 = scmp.ne.s32.totalorder %s97, %s98
    %p112 = scmp.eq.s32.totalorder %s17, 1
    %p113 = por %p111, %p112
    %p115 = scmp.ne.s32.totalorder %s98, %s114
    %p116 = scmp.eq.s32.totalorder %s17, 0
    %p117 = por %p115, %p116
    %s118 = ssub.s32 %s11, %s18
    %p119 = scmp.eq.s32.totalorder %s118, 0
    %s121 = sadd.s32 %s120, 1
    %s122 = scalar_select %p119, %s120, %s121
    %p125 = pneg %p119
    %p126 = scmp.eq.s32.totalorder %s11, 1
    %p127 = por %p125, %p126
    %p128 = scmp.ne.s32.totalorder %s120, %s123
    %p129 = scmp.eq.s32.totalorder %s11, 0
    %p130 = por %p128, %p129
    %p131 = scmp.ne.s32.totalorder %s120, %s123
    %p132 = scmp.eq.s32.totalorder %s16, 1
    %p133 = por %p131, %p132
    %p134 = scmp.ne.s32.totalorder %s123, %s124
    %p135 = scmp.eq.s32.totalorder %s16, 0
    %p136 = por %p134, %p135
    %p137 = scmp.ne.s32.totalorder %s123, %s124
    %p138 = scmp.eq.s32.totalorder %s17, 1
    %p139 = por %p137, %p138
    %p141 = scmp.ne.s32.totalorder %s124, %s140
    %p142 = scmp.eq.s32.totalorder %s17, 0
    %p143 = por %p141, %p142
    %p144 = scmp.le.s32.totalorder 1, %s11
    %p145 = scmp.lt.s32.totalorder %s11, 3
    %p146 = pnand %p144, %p145
    %p147 = pneg %p146
    // Predicated region
    $region9: #{inception_pool_forward.2} parent=5 // pred_check
      _
    $region10: #{inception_pool_forward.2} parent=5 // pred_check_branch
      %149 = sbr.rel (%p146) target = $region12
    $region11: #{inception_pool_forward.2} parent=5 // pred_region
      %s150 = ssub.s32 %s11, 1
      // Predicated region
      $region13: #{inception_pool_forward.2} parent=11 // pred_check
        %p151 = pneg %p58
      $region14: #{inception_pool_forward.2} parent=11 // pred_check_branch
        %153 = sbr.rel (%p151) target = $region16
      $region15: #{inception_pool_forward.2} parent=11 // pred_region
        _
      $region16: #{inception_pool_forward.2} parent=11 // pred_fallthru
        _
    $region12: #{inception_pool_forward.2} parent=5 // pred_fallthru
      _
    %p154 = scmp.lt.s32.totalorder %s11, 2
    // Predicated region
    $region17: #{inception_pool_forward.2} parent=5 // pred_check
      %p155 = pneg %p154
    $region18: #{inception_pool_forward.2} parent=5 // pred_check_branch
      %157 = sbr.rel (%p155) target = $region20
    $region19: #{inception_pool_forward.2} parent=5 // pred_region
      // Predicated region
      $region21: #{inception_pool_forward.2} parent=19 // pred_check
        %p158 = pneg %p31
      $region22: #{inception_pool_forward.2} parent=19 // pred_check_branch
        %160 = sbr.rel (%p158) target = $region24
      $region23: #{inception_pool_forward.2} parent=19 // pred_region
        %p161 = scmp.lt.s32.totalorder %s11, 1
        %s162 = scalar_select %p161, %s11, 1
        %s163 = smul.addr %s162, 12
        %s164 = smul.addr %s163, 4
        %s165 = scalar_lea.vmem %s0, %s164
      $region24: #{inception_pool_forward.2} parent=19 // pred_fallthru
        _
    $region20: #{inception_pool_forward.2} parent=5 // pred_fallthru
      _
    %p166 = scmp.le.s32.totalorder 1, %s11
    %p167 = scmp.lt.s32.totalorder %s11, 3
    %p168 = pnand %p166, %p167
    %p169 = pneg %p168
    // Predicated region
    $region25: #{inception_pool_forward.2} parent=5 // pred_check
      _
    $region26: #{inception_pool_forward.2} parent=5 // pred_check_branch
      %171 = sbr.rel (%p168) target = $region28
    $region27: #{inception_pool_forward.2} parent=5 // pred_region
      %s172 = ssub.s32 %s11, 1
      %p173 = scmp.lt.s32.totalorder %s16, 1
      %s174 = scalar_select %p173, %s16, 1
      %s175 = smul.addr %s174, 12
      %s176 = smul.addr %s175, 4
      %s177 = scalar_lea.vmem %s0, %s176
      %p178 = pneg %p37
      %p179 = pneg %p34
      %p180 = pneg %p58
      %p181 = pneg %p55
      %p182 = pneg %p84
      %p183 = pneg %p81
      %p184 = scmp.lt.s32.totalorder %s16, 1
      %s185 = scalar_select %p184, %s16, 1
      %s186 = smul.addr %s185, 4
      %s187 = smul.addr %s186, 4
      %s188 = scalar_lea.vmem %s2, %s187
      %p189 = pneg %p110
      %p190 = pneg %p107
      %p191 = scmp.lt.s32.totalorder %s16, 1
      %s192 = scalar_select %p191, %s16, 1
      %s193 = scalar_lea.vmem %s3, %s192
      %p194 = pneg %p136
      %p195 = pneg %p133
      %p196 = scmp.lt.s32.totalorder %s16, 1
      %s197 = scalar_select %p196, %s16, 1
      %s198 = scalar_lea.vmem %s4, %s197
      %p199 = scmp.lt.s32.totalorder %s16, 1
      %s200 = scalar_select %p199, %s16, 1
      %s201 = smul.addr %s200, 12
      %s202 = smul.addr %s201, 4
      %s203 = scalar_lea.vmem %s0, %s202
      %p204 = scmp.lt.s32.totalorder %s16, 1
      %s205 = scalar_select %p204, %s16, 1
      %s206 = smul.addr %s205, 4
      %s207 = smul.addr %s206, 4
      %s208 = scalar_lea.vmem %s2, %s207
      %p209 = scmp.lt.s32.totalorder %s16, 1
      %s210 = scalar_select %p209, %s16, 1
      %s211 = scalar_lea.vmem %s3, %s210
      %p212 = scmp.lt.s32.totalorder %s16, 1
      %s213 = scalar_select %p212, %s16, 1
      %s214 = scalar_lea.vmem %s4, %s213
      %v216 = vld [vmem:[%s203] sm:$0xf]
      %v217 = vld [vmem:[%s203 + $0x4] sm:$0x1]
      %v218 = vld [vmem:[%s203 + $0x8] sm:$0xf]
      %v219 = vld [vmem:[%s203 + $0xc] sm:$0x1]
      %v220 = vld [vmem:[%s203 + $0x10] sm:$0xf]
      %v221 = vld [vmem:[%s203 + $0x14] sm:$0x1]
      %v222 = vld [vmem:[%s203 + $0x18] sm:$0xf]
      %v223 = vld [vmem:[%s203 + $0x1c] sm:$0x1]
      %v224 = vld [vmem:[%s203 + $0x20] sm:$0xf]
      %v225 = vld [vmem:[%s203 + $0x24] sm:$0x1]
      %v226 = vld [vmem:[%s203 + $0x28] sm:$0xf]
      %v227 = vld [vmem:[%s203 + $0x2c] sm:$0x1]
      %v228 = vunpack.c.l.bf16 %v216
      %v229 = vunpack.c.l.bf16 %v217
      %v230 = vunpack.c.l.bf16 %v218
      %v231 = vunpack.c.l.bf16 %v219
      %v232 = vunpack.c.l.bf16 %v220
      %v233 = vunpack.c.l.bf16 %v221
      %v234 = vunpack.c.l.bf16 %v222
      %v235 = vunpack.c.l.bf16 %v223
      %v236 = vunpack.c.l.bf16 %v224
      %v237 = vunpack.c.l.bf16 %v225
      %v238 = vunpack.c.l.bf16 %v226
      %v239 = vunpack.c.l.bf16 %v227
      %vm252 = vcmask 1046528
      %v253 = vrot.slane %v228, 1
      %v254 = vrot.slane %v229, 1
      %v255 = vsel %vm252, %v253, %v254
      %v256 = vrot.slane %v230, 1
      %v257 = vrot.slane %v231, 1
      %v258 = vsel %vm252, %v256, %v257
      %v259 = vrot.slane %v232, 1
      %v260 = vrot.slane %v233, 1
      %v261 = vsel %vm252, %v259, %v260
      %v262 = vrot.slane %v234, 1
      %v263 = vrot.slane %v235, 1
      %v264 = vsel %vm252, %v262, %v263
      %v265 = vrot.slane %v236, 1
      %v266 = vrot.slane %v237, 1
      %v267 = vsel %vm252, %v265, %v266
      %v268 = vrot.slane %v238, 1
      %v269 = vrot.slane %v239, 1
      %v270 = vsel %vm252, %v268, %v269
      %v277 = vadd.f32 %v228, %v255
      %v278 = vadd.f32 %v230, %v258
      %v279 = vadd.f32 %v232, %v261
      %v280 = vadd.f32 %v234, %v264
      %v281 = vadd.f32 %v236, %v267
      %v282 = vadd.f32 %v238, %v270
      %vm283 = vcmask 1045504
      %v284 = vrot.slane %v228, 2
      %v285 = vrot.slane %v229, 2
      %v286 = vsel %vm283, %v284, %v285
      %v287 = vrot.slane %v230, 2
      %v288 = vrot.slane %v231, 2
      %v289 = vsel %vm283, %v287, %v288
      %v290 = vrot.slane %v232, 2
      %v291 = vrot.slane %v233, 2
      %v292 = vsel %vm283, %v290, %v291
      %v293 = vrot.slane %v234, 2
      %v294 = vrot.slane %v235, 2
      %v295 = vsel %vm283, %v293, %v294
      %v296 = vrot.slane %v236, 2
      %v297 = vrot.slane %v237, 2
      %v298 = vsel %vm283, %v296, %v297
      %v299 = vrot.slane %v238, 2
      %v300 = vrot.slane %v239, 2
      %v301 = vsel %vm283, %v299, %v300
      %v308 = vadd.f32 %v277, %v286
      %v309 = vadd.f32 %v278, %v289
      %v310 = vadd.f32 %v279, %v292
      %v311 = vadd.f32 %v280, %v295
      %v312 = vadd.f32 %v281, %v298
      %v313 = vadd.f32 %v282, %v301
      %v314 = vadd.f32 %v308, %v309
      %v315 = vadd.f32 %v309, %v310
      %v316 = vadd.f32 %v310, %v311
      %v317 = vadd.f32 %v311, %v312
      %v318 = vadd.f32 %v314, %v310
      %v319 = vadd.f32 %v315, %v311
      %v320 = vadd.f32 %v316, %v312
      %v321 = vadd.f32 %v317, %v313
      %v322 = vpack.c.bf16 %v319, %v318
      %v323 = vpack.c.bf16 %v321, %v320
      %v324 = vld [vmem:[%s1] sm:$0xf]
      %v325 = vld [vmem:[%s1 + $0x4] sm:$0xf]
      %v326 = vld [vmem:[%s1 + $0x8] sm:$0xf]
      %v327 = vld [vmem:[%s1 + $0xc] sm:$0xf]
      %v328 = vld [vmem:[%s1 + $0x10] sm:$0xf]
      %v329 = vld [vmem:[%s1 + $0x14] sm:$0xf]
      %v330 = vld [vmem:[%s1 + $0x18] sm:$0xf]
      %v331 = vld [vmem:[%s1 + $0x1c] sm:$0xf]
      %v332 = vld [vmem:[%s1 + $0x20] sm:$0xf]
      %v333 = vld [vmem:[%s1 + $0x24] sm:$0xf]
      %v334 = vld [vmem:[%s1 + $0x28] sm:$0xf]
      %v335 = vld [vmem:[%s1 + $0x2c] sm:$0xf]
      %v336 = vld [vmem:[%s1 + $0x30] sm:$0xf]
      %v337 = vld [vmem:[%s1 + $0x34] sm:$0xf]
      %v338 = vld [vmem:[%s1 + $0x38] sm:$0xf]
      %v339 = vld [vmem:[%s1 + $0x3c] sm:$0xf]
      %v356 = vunpack.c.l.b16 %v324
      %v357 = vunpack.c.l.b16 %v325
      %v358 = vunpack.c.l.b16 %v326
      %v359 = vunpack.c.l.b16 %v327
      %v360 = vunpack.c.l.b16 %v328
      %v361 = vunpack.c.l.b16 %v329
      %v362 = vunpack.c.l.b16 %v330
      %v363 = vunpack.c.l.b16 %v331
      %v364 = vunpack.c.l.b16 %v332
      %v365 = vunpack.c.l.b16 %v333
      %v366 = vunpack.c.l.b16 %v334
      %v367 = vunpack.c.l.b16 %v335
      %v368 = vunpack.c.l.b16 %v336
      %v369 = vunpack.c.l.b16 %v337
      %v370 = vunpack.c.l.b16 %v338
      %v371 = vunpack.c.l.b16 %v339
      %v372 = vpack.c.b16 %v357, %v356
      %v373 = vpack.c.b16 %v359, %v358
      %v374 = vpack.c.b16 %v361, %v360
      %v375 = vpack.c.b16 %v363, %v362
      %v376 = vpack.c.b16 %v365, %v364
      %v377 = vpack.c.b16 %v367, %v366
      %v378 = vpack.c.b16 %v369, %v368
      %v379 = vpack.c.b16 %v371, %v370
      %388 = vmatprep.subr.bf16.mxu0 0
      %389 = vmatpush1.bf16.msra.mxu0 %v372
      %390 = vmatprep.subr.bf16.mxu0 0
      %391 = vmatpush1.bf16.msra.mxu0 %v373
      %392 = vmatprep.subr.bf16.mxu0 0
      %393 = vmatpush1.bf16.msra.mxu0 %v374
      %394 = vmatprep.subr.bf16.mxu0 0
      %395 = vmatpush1.bf16.msra.mxu0 %v375
      %396 = vmatprep.subr.bf16.mxu0 0
      %397 = vmatpush1.bf16.msra.mxu0 %v376
      %398 = vmatprep.subr.bf16.mxu0 0
      %399 = vmatpush1.bf16.msra.mxu0 %v377
      %400 = vmatprep.subr.bf16.mxu0 0
      %401 = vmatpush1.bf16.msra.mxu0 %v378
      %402 = vmatprep.subr.bf16.mxu0 0
      %403 = vmatpush1.bf16.msra.mxu0 %v379
      %404 = vmatprep.subr.bf16.mxu0 0
      %405 = vmatpush1.bf16.msra.mxu0 0
      %406 = vmatprep.subr.bf16.mxu0 0
      %407 = vmatpush1.bf16.msra.mxu0 0
      %408 = vmatprep.subr.bf16.mxu0 0
      %409 = vmatpush1.bf16.msra.mxu0 0
      %410 = vmatprep.subr.bf16.mxu0 0
      %411 = vmatpush1.bf16.msra.mxu0 0
      %412 = vmatprep.subr.bf16.mxu0 0
      %413 = vmatpush1.bf16.msra.mxu0 0
      %414 = vmatprep.subr.bf16.mxu0 0
      %415 = vmatpush1.bf16.msra.mxu0 0
      %416 = vmatprep.subr.bf16.mxu0 0
      %417 = vmatpush1.bf16.msra.mxu0 0
      %418 = vmatprep.subr.bf16.mxu0 0
      %419 = vmatpush1.bf16.msra.mxu0 0
      %420 = vmatprep.mubr.bf16.mxu0 0
      %421 = vmatmul.mubr.bf16.gmra.mrb[0].mxu0 %v322
      %v422 = vpop.f32.mrb[0].mxu0
      %v423 = vadd.f32 0.0, %v422
      %v424 = vpop.f32.mrb[0].mxu0
      %v425 = vpop.f32.mrb[0].mxu0
      %v426 = vadd.f32 0.0, %v425
      %v427 = vpop.f32.mrb[0].mxu0
      %428 = vmatprep.mubr.bf16.mxu0 0
      %429 = vmatmul.mubr.bf16.gmra.mrb[0].mxu0 %v323
      %v430 = vpop.f32.mrb[0].mxu0
      %v431 = vadd.f32 0.0, %v430
      %v432 = vpop.f32.mrb[0].mxu0
      %v433 = vpop.f32.mrb[0].mxu0
      %v434 = vadd.f32 0.0, %v433
      %v435 = vpop.f32.mrb[0].mxu0
      %436 = vdwg.mxu0
      %v437 = vpack.c.bf16 %v426, %v423
      %v438 = vpack.c.bf16 %v434, %v431
      %v441 = vunpack.c.l.b16 %v437
      %v442 = vunpack.c.h.b16 %v437
      %v443 = vunpack.c.l.b16 %v438
      %v444 = vunpack.c.h.b16 %v438
      %v445 = vpack.c.b16 %v441, %v441
      %v446 = vpack.c.b16 %v442, %v442
      %v447 = vpack.c.b16 %v443, %v443
      %v448 = vpack.c.b16 %v444, %v444
      %453 = vst [vmem:[%s208] sm:$0xf] %v445
      %454 = vst [vmem:[%s208 + $0x4] sm:$0xf] %v446
      %455 = vst [vmem:[%s208 + $0x8] sm:$0xf] %v447
      %456 = vst [vmem:[%s208 + $0xc] sm:$0xf] %v448
      %v457 = vunpack.c.l.bf16 %v437
      %v458 = vunpack.c.h.bf16 %v437
      %v459 = vunpack.c.l.bf16 %v438
      %v460 = vunpack.c.h.bf16 %v438
      %v461 = vadd.f32 %v457, %v458
      %v462 = vadd.f32 %v461, %v459
      %v463 = vadd.f32 %v462, %v460
      %v464 = vrot.slane %v463, 4
      %v465 = vadd.f32 %v463, %v464
      %v466 = vrot.slane %v465, 2
      %v467 = vadd.f32 %v465, %v466
      %v468 = vrot.slane %v467, 1
      %v469 = vadd.f32 %v467, %v468
      %470 = vst [vmem:[%s211] sm:$0x1] %v469
      %v471 = vmul.f32 %v457, %v457
      %v472 = vmul.f32 %v458, %v458
      %v473 = vmul.f32 %v459, %v459
      %v474 = vmul.f32 %v460, %v460
      %v475 = vadd.f32 %v471, %v472
      %v476 = vadd.f32 %v475, %v473
      %v477 = vadd.f32 %v476, %v474
      %v478 = vrot.slane %v477, 4
      %v479 = vadd.f32 %v477, %v478
      %v480 = vrot.slane %v479, 2
      %v481 = vadd.f32 %v479, %v480
      %v482 = vrot.slane %v481, 1
      %v483 = vadd.f32 %v481, %v482
      %484 = vst [vmem:[%s214] sm:$0x1] %v483
      %p485 = scmp.lt.s32.totalorder %s16, 1
      %s486 = scalar_select %p485, %s16, 1
      %s487 = smul.addr %s486, 4
      %s488 = smul.addr %s487, 4
      %s489 = scalar_lea.vmem %s2, %s488
      %p490 = scmp.lt.s32.totalorder %s16, 1
      %s491 = scalar_select %p490, %s16, 1
      %s492 = scalar_lea.vmem %s3, %s491
      %p493 = scmp.lt.s32.totalorder %s16, 1
      %s494 = scalar_select %p493, %s16, 1
      %s495 = scalar_lea.vmem %s4, %s494
      // Predicated region
      $region29: #{inception_pool_forward.2} parent=27 // pred_check
        %p496 = pneg %p81
      $region30: #{inception_pool_forward.2} parent=27 // pred_check_branch
        %498 = sbr.rel (%p496) target = $region32
      $region31: #{inception_pool_forward.2} parent=27 // pred_region
        _
      $region32: #{inception_pool_forward.2} parent=27 // pred_fallthru
        _
      // Predicated region
      $region33: #{inception_pool_forward.2} parent=27 // pred_check
        %p499 = pneg %p107
      $region34: #{inception_pool_forward.2} parent=27 // pred_check_branch
        %501 = sbr.rel (%p499) target = $region36
      $region35: #{inception_pool_forward.2} parent=27 // pred_region
        _
      $region36: #{inception_pool_forward.2} parent=27 // pred_fallthru
        _
      // Predicated region
      $region37: #{inception_pool_forward.2} parent=27 // pred_check
        %p502 = pneg %p133
      $region38: #{inception_pool_forward.2} parent=27 // pred_check_branch
        %504 = sbr.rel (%p502) target = $region40
      $region39: #{inception_pool_forward.2} parent=27 // pred_region
        _
      $region40: #{inception_pool_forward.2} parent=27 // pred_fallthru
        _
    $region28: #{inception_pool_forward.2} parent=5 // pred_fallthru
      _
    %p505 = scmp.le.s32.totalorder 2, %s11
    // Predicated region
    $region41: #{inception_pool_forward.2} parent=5 // pred_check
      %p506 = pneg %p505
    $region42: #{inception_pool_forward.2} parent=5 // pred_check_branch
      %508 = sbr.rel (%p506) target = $region44
    $region43: #{inception_pool_forward.2} parent=5 // pred_region
      %s509 = ssub.s32 %s11, 2
      // Predicated region
      $region45: #{inception_pool_forward.2} parent=43 // pred_check
        %p510 = pneg %p87
      $region46: #{inception_pool_forward.2} parent=43 // pred_check_branch
        %512 = sbr.rel (%p510) target = $region48
      $region47: #{inception_pool_forward.2} parent=43 // pred_region
        %p513 = scmp.lt.s32.totalorder %s17, 1
        %s514 = scalar_select %p513, %s17, 1
        %s515 = smul.addr %s514, 4
        %s516 = smul.addr %s515, 4
        %s517 = scalar_lea.vmem %s2, %s516
      $region48: #{inception_pool_forward.2} parent=43 // pred_fallthru
        _
      // Predicated region
      $region49: #{inception_pool_forward.2} parent=43 // pred_check
        %p518 = pneg %p113
      $region50: #{inception_pool_forward.2} parent=43 // pred_check_branch
        %520 = sbr.rel (%p518) target = $region52
      $region51: #{inception_pool_forward.2} parent=43 // pred_region
        %p521 = scmp.lt.s32.totalorder %s17, 1
        %s522 = scalar_select %p521, %s17, 1
        %s523 = scalar_lea.vmem %s3, %s522
      $region52: #{inception_pool_forward.2} parent=43 // pred_fallthru
        _
      // Predicated region
      $region53: #{inception_pool_forward.2} parent=43 // pred_check
        %p524 = pneg %p139
      $region54: #{inception_pool_forward.2} parent=43 // pred_check_branch
        %526 = sbr.rel (%p524) target = $region56
      $region55: #{inception_pool_forward.2} parent=43 // pred_region
        %p527 = scmp.lt.s32.totalorder %s17, 1
        %s528 = scalar_select %p527, %s17, 1
        %s529 = scalar_lea.vmem %s4, %s528
      $region56: #{inception_pool_forward.2} parent=43 // pred_fallthru
        _
    $region44: #{inception_pool_forward.2} parent=5 // pred_fallthru
      _
  $region6: #{inception_pool_forward.2} parent=0 // loop_footer
    %s15 = sadd.s32 1, %s11
  $region7: #{inception_pool_forward.2} parent=0 // loop_footer_branch
    %10 = sbr.rel target = $region3
  $region8: #{inception_pool_forward.2} parent=0 // loop_exit
    _

// kernel: inception_pool_forward.3
$region0: #{inception_pool_forward.3}
  #allocation0 [shape = 'u32[]', space=smem, size = 0x4, offset = 0x4, fixed_abs, tag = 'smem constant byte address 0x4 - core index']
  #allocation1 [shape = 'u32[144,128]{1,0:T(1,128)}', space=vmem, size = 0x12000, scoped, tag = 'internal scratch']
  %s0 = inlined_call_operand.vmem [shape: bf16[64,128], index: 0, kind: input, shape index: {}]
  %s1 = inlined_call_operand.vmem [shape: f32[1,128], index: 1, kind: input, shape index: {}]
  %s2 = inlined_call_operand.vmem [shape: f32[1,128], index: 2, kind: input, shape index: {}]
  %s3 = inlined_call_operand.vmem [shape: f32[64,128], index: 3, kind: output, shape index: {}]
  %s4 = sld [smem:[#allocation0]]
  $region22: #{inception_pool_forward.3} parent=0
    _
  %s6 = ssub.s32 1, %s4
  %s7 = scalar_select 0, %s6, %s4
  // Predicated region
  $region2: #{inception_pool_forward.3} parent=0 // pred_check
    _
  $region3: #{inception_pool_forward.3} parent=0 // pred_check_branch
    %9 = sbr.rel (0) target = $region5
  $region4: #{inception_pool_forward.3} parent=0 // pred_region
    _
  $region5: #{inception_pool_forward.3} parent=0 // pred_fallthru
    _
  // Predicated region
  $region6: #{inception_pool_forward.3} parent=0 // pred_check
    _
  $region7: #{inception_pool_forward.3} parent=0 // pred_check_branch
    %11 = sbr.rel (0) target = $region9
  $region8: #{inception_pool_forward.3} parent=0 // pred_region
    _
  $region9: #{inception_pool_forward.3} parent=0 // pred_fallthru
    _
  // Predicated region
  $region10: #{inception_pool_forward.3} parent=0 // pred_check
    _
  $region11: #{inception_pool_forward.3} parent=0 // pred_check_branch
    %13 = sbr.rel (0) target = $region13
  $region12: #{inception_pool_forward.3} parent=0 // pred_region
    _
  $region13: #{inception_pool_forward.3} parent=0 // pred_fallthru
    _
  %v14 = vld [vmem:[%s0] sm:$0xf]
  %v15 = vld [vmem:[%s0 + $0x4] sm:$0xf]
  %v16 = vld [vmem:[%s0 + $0x8] sm:$0xf]
  %v17 = vld [vmem:[%s0 + $0xc] sm:$0xf]
  %v18 = vld [vmem:[%s0 + $0x10] sm:$0xf]
  %v19 = vld [vmem:[%s0 + $0x14] sm:$0xf]
  %v20 = vld [vmem:[%s0 + $0x18] sm:$0xf]
  %v21 = vld [vmem:[%s0 + $0x1c] sm:$0xf]
  %v22 = vunpack.c.l.bf16 %v14
  %v23 = vunpack.c.l.bf16 %v15
  %v24 = vunpack.c.l.bf16 %v16
  %v25 = vunpack.c.l.bf16 %v17
  %v26 = vunpack.c.l.bf16 %v18
  %v27 = vunpack.c.l.bf16 %v19
  %v28 = vunpack.c.l.bf16 %v20
  %v29 = vunpack.c.l.bf16 %v21
  %v30 = vld [vmem:[%s1] sm:$0x1]
  %v32 = vlaneseq
  %v33 = vshrl.u32 %v32, 7
  %v34 = vsub.s32 0, %v33
  %v35 = vrot.slane %v30, %v34
  %v37 = vmul.f32 %v22, %v35
  %v38 = vmul.f32 %v23, %v35
  %v39 = vmul.f32 %v24, %v35
  %v40 = vmul.f32 %v25, %v35
  %v41 = vmul.f32 %v26, %v35
  %v42 = vmul.f32 %v27, %v35
  %v43 = vmul.f32 %v28, %v35
  %v44 = vmul.f32 %v29, %v35
  %v45 = vld [vmem:[%s2] sm:$0x1]
  %v47 = vlaneseq
  %v48 = vshrl.u32 %v47, 7
  %v49 = vsub.s32 0, %v48
  %v50 = vrot.slane %v45, %v49
  %v52 = vadd.f32 %v37, %v50
  %v53 = vadd.f32 %v38, %v50
  %v54 = vadd.f32 %v39, %v50
  %v55 = vadd.f32 %v40, %v50
  %v56 = vadd.f32 %v41, %v50
  %v57 = vadd.f32 %v42, %v50
  %v58 = vadd.f32 %v43, %v50
  %v59 = vadd.f32 %v44, %v50
  %v60 = vmul.f32 %v52, 0.5
  %v61 = vmul.f32 %v53, 0.5
  %v62 = vmul.f32 %v54, 0.5
  %v63 = vmul.f32 %v55, 0.5
  %v64 = vmul.f32 %v56, 0.5
  %v65 = vmul.f32 %v57, 0.5
  %v66 = vmul.f32 %v58, 0.5
  %v67 = vmul.f32 %v59, 0.5
  %v68 = vmul.f32 %v52, 0.70710677
  %v69 = vmul.f32 %v53, 0.70710677
  %v70 = vmul.f32 %v54, 0.70710677
  %v71 = vmul.f32 %v55, 0.70710677
  %v72 = vmul.f32 %v56, 0.70710677
  %v73 = vmul.f32 %v57, 0.70710677
  %v74 = vmul.f32 %v58, 0.70710677
  %v75 = vmul.f32 %v59, 0.70710677
  %v76 = verf.f32.pop %v68
  %v77 = verf.f32.pop %v69
  %v78 = verf.f32.pop %v70
  %v79 = verf.f32.pop %v71
  %v80 = verf.f32.pop %v72
  %v81 = verf.f32.pop %v73
  %v82 = verf.f32.pop %v74
  %v83 = verf.f32.pop %v75
  %v84 = vadd.f32 %v76, 1.0
  %v85 = vadd.f32 %v77, 1.0
  %v86 = vadd.f32 %v78, 1.0
  %v87 = vadd.f32 %v79, 1.0
  %v88 = vadd.f32 %v80, 1.0
  %v89 = vadd.f32 %v81, 1.0
  %v90 = vadd.f32 %v82, 1.0
  %v91 = vadd.f32 %v83, 1.0
  %v92 = vmul.f32 %v60, %v84
  %v93 = vmul.f32 %v61, %v85
  %v94 = vmul.f32 %v62, %v86
  %v95 = vmul.f32 %v63, %v87
  %v96 = vmul.f32 %v64, %v88
  %v97 = vmul.f32 %v65, %v89
  %v98 = vmul.f32 %v66, %v90
  %v99 = vmul.f32 %v67, %v91
  %100 = vst [vmem:[%s3] sm:$0xff] %v92
  %101 = vst [vmem:[%s3 + $0x8] sm:$0xff] %v93
  %102 = vst [vmem:[%s3 + $0x10] sm:$0xff] %v94
  %103 = vst [vmem:[%s3 + $0x18] sm:$0xff] %v95
  %104 = vst [vmem:[%s3 + $0x20] sm:$0xff] %v96
  %105 = vst [vmem:[%s3 + $0x28] sm:$0xff] %v97
  %106 = vst [vmem:[%s3 + $0x30] sm:$0xff] %v98
  %107 = vst [vmem:[%s3 + $0x38] sm:$0xff] %v99
  // Predicated region
  $region14: #{inception_pool_forward.3} parent=0 // pred_check
    _
  $region15: #{inception_pool_forward.3} parent=0 // pred_check_branch
    %109 = sbr.rel (0) target = $region17
  $region16: #{inception_pool_forward.3} parent=0 // pred_region
    _
  $region17: #{inception_pool_forward.3} parent=0 // pred_fallthru
    _
  // Predicated region
  $region18: #{inception_pool_forward.3} parent=0 // pred_check
    _
  $region19: #{inception_pool_forward.3} parent=0 // pred_check_branch
    %111 = sbr.rel (0) target = $region21
  $region20: #{inception_pool_forward.3} parent=0 // pred_region
    _
  $region21: #{inception_pool_forward.3} parent=0 // pred_fallthru
    _

</llo_original>
